<compile_context>
chip_gen: v6e
topology: v6e:2x2x1
jax: 0.10.0
libtpu: 0.0.40
codegen_flags: <defaults>
</compile_context>

<pallas_src>
import functools

import jax
import jax.numpy as jnp
from jax.experimental import pallas as pl
from jax.experimental.pallas import tpu as pltpu

LANE = 128      # lane width (last dim)
SUBLANE = 8     # f32 sublane height (second-to-last dim)
MAX_BATCH_TILE = 512
ACT_TILE_BYTES_BUDGET = 2 << 20   # keep one f32 activation tile under ~2 MiB


def _round_up(x, m):
    return (x + m - 1) // m * m


def _make_fused_mlp_kernel(num_layers):
    """Kernel body for `num_layers` FFLinear layers fused together.

    Ref order: (x_ref, w0_ref, b0_ref, w1_ref, b1_ref, ..., o_ref)
    """

    def kernel(*refs):
        x_ref = refs[0]
        o_ref = refs[1 + 2 * num_layers]

        h = x_ref[...].astype(jnp.float32)            # (tm, D0_pad) f32
        for l in range(num_layers):                   # static unroll over layers
            w_ref = refs[1 + 2 * l]                   # (Din_pad, Dout_pad) bf16
            b_ref = refs[2 + 2 * l]                   # (1, Dout_pad) f32

            # Per-sample L2 norm over the (padded) feature row; padded columns
            # are exactly zero so the norm matches the unpadded computation.
            norm = jnp.sqrt(jnp.sum(h * h, axis=1, keepdims=True))
            inv = pl.reciprocal(norm + 1e-4, approx=True)   # EUP, ~free
            h_dir = (h * inv).astype(jnp.bfloat16)

            # bf16 operands into the MXU, f32 accumulation.
            acc = jnp.dot(h_dir, w_ref[...], preferred_element_type=jnp.float32)
            h = jnp.maximum(acc + b_ref[...].astype(jnp.float32), 0.0)

        o_ref[...] = h.astype(o_ref.dtype)

    return kernel


def init_params(key, hidden_dimensions):
    """torch.nn.Linear-style init: W, b ~ U(-1/sqrt(fan_in), 1/sqrt(fan_in)).

    Returns:
      kernel_params: list of (w_t_pad bf16 (Din_pad, Dout_pad), b_pad f32 (1, Dout_pad))
                     pre-transposed + zero-padded, done ONCE here (not per forward).
      raw_params:    list of (w f32 (Dout, Din), b f32 (Dout,)) for the reference.
    """
    kernel_params, raw_params = [], []
    for i in range(len(hidden_dimensions) - 1):
        din, dout = hidden_dimensions[i], hidden_dimensions[i + 1]
        din_p, dout_p = _round_up(din, LANE), _round_up(dout, LANE)
        key, kw, kb = jax.random.split(key, 3)
        bound = 1.0 / (din ** 0.5)
        w = jax.random.uniform(kw, (dout, din), jnp.float32, -bound, bound)
        b = jax.random.uniform(kb, (dout,), jnp.float32, -bound, bound)

        w_t_pad = (jnp.zeros((din_p, dout_p), jnp.float32)
                   .at[:din, :dout].set(w.T)
                   .astype(jnp.bfloat16))
        b_pad = jnp.zeros((1, dout_p), jnp.float32).at[0, :dout].set(b)

        kernel_params.append((w_t_pad, b_pad))
        raw_params.append((w, b))
    return kernel_params, raw_params


@functools.partial(jax.jit, static_argnames=("out_dim",))
def ff_mlp_forward(x, kernel_params, out_dim):
    """FFMultiLayerPerceptron.forward: one fused Pallas call over all layers."""
    B, Din = x.shape
    num_layers = len(kernel_params)
    d0_pad = kernel_params[0][0].shape[0]
    d_last_pad = kernel_params[-1][0].shape[1]

    # Batch tiling: 8-sublane-aligned tiles; size capped so one f32 activation
    # tile at the widest layer stays within the VMEM budget.
    max_dpad = max(max(w.shape) for w, _ in kernel_params)
    tile_cap = max(SUBLANE, (ACT_TILE_BYTES_BUDGET // (4 * max_dpad)) // SUBLANE * SUBLANE)
    tm = min(MAX_BATCH_TILE, tile_cap, _round_up(B, SUBLANE))
    b_pad = _round_up(B, tm)
    grid = (b_pad // tm,)

    x_pad = jnp.zeros((b_pad, d0_pad), x.dtype).at[:B, :Din].set(x)

    in_specs = [pl.BlockSpec((tm, d0_pad), lambda i: (i, 0))]
    flat_args = [x_pad]
    for w_t_pad, b_row in kernel_params:
        din_p, dout_p = w_t_pad.shape
        in_specs.append(pl.BlockSpec((din_p, dout_p), lambda i: (0, 0)))  # VMEM-resident
        in_specs.append(pl.BlockSpec((1, dout_p), lambda i: (0, 0)))      # VMEM-resident
        flat_args.extend([w_t_pad, b_row])

    out_pad = pl.pallas_call(
        _make_fused_mlp_kernel(num_layers),
        out_shape=jax.ShapeDtypeStruct((b_pad, d_last_pad), x.dtype),
        grid_spec=pltpu.PrefetchScalarGridSpec(
            num_scalar_prefetch=0,
            grid=grid,
            in_specs=in_specs,
            out_specs=pl.BlockSpec((tm, d_last_pad), lambda i: (i, 0)),
        ),
        compiler_params=pltpu.CompilerParams(
            # batch blocks are independent -> megacore split on v7x
            dimension_semantics=("parallel",)),
    )(*flat_args)

    return out_pad[:B, :out_dim]


def ff_mlp_reference(x, raw_params):
    """Pure-JAX f32 reference matching the PyTorch module exactly."""
    h = x
    for w, b in raw_params:
        norm = jnp.sqrt(jnp.sum(h * h, axis=1, keepdims=True))
        h_dir = h / (norm + 1e-4)
        h = jnp.maximum(h_dir @ w.T + b, 0.0)
    return h


if __name__ == "__main__":
    key = jax.random.PRNGKey(0)
    # hidden_dimensions: first entry is the input dim (as in the module docstring).
    hidden_dimensions = [32, 64, 16]
    batch = 8

    key, kx = jax.random.split(key)
    x = jax.random.normal(kx, (batch, hidden_dimensions[0]), jnp.float32)
    kernel_params, raw_params = init_params(key, hidden_dimensions)

    out = ff_mlp_forward(x, kernel_params, hidden_dimensions[-1])
    out = jax.block_until_ready(out)

    assert out.shape == (batch, hidden_dimensions[-1])
    ref = ff_mlp_reference(x, raw_params)
    # bf16 matmul operands + approx reciprocal -> loose tolerance vs f32 reference.
    assert bool(jnp.all(jnp.isfinite(out)))
    assert bool(jnp.allclose(out, ref, atol=2e-2, rtol=2e-2)), (
        float(jnp.max(jnp.abs(out - ref))))
    print("KERNEL_OK")
</pallas_src>

<mosaic_0001>
module attributes {stable_mosaic.version = 11 : i64} {
  func.func @kernel(%arg0: i32, %arg1: memref<8x128xf32, #tpu.memory_space<vmem>>, %arg2: memref<128x128xbf16, #tpu.memory_space<vmem>>, %arg3: memref<1x128xf32, #tpu.memory_space<vmem>>, %arg4: memref<128x128xbf16, #tpu.memory_space<vmem>>, %arg5: memref<1x128xf32, #tpu.memory_space<vmem>>, %arg6: memref<8x128xf32, #tpu.memory_space<vmem>>) attributes {dimension_semantics = [#tpu.dimension_semantics<parallel>], iteration_bounds = array<i64: 1>, scalar_prefetch = 0 : i64, scratch_operands = 0 : i64, tpu.core_type = #tpu.core_type<tc>, window_params = [{transform_indices = @transform_0, window_bounds = array<i64: 8, 128>}, {pipeline_mode = #tpu.pipeline_mode<synchronous>, transform_indices = @transform_1, window_bounds = array<i64: 128, 128>}, {pipeline_mode = #tpu.pipeline_mode<synchronous>, transform_indices = @transform_2, window_bounds = array<i64: 1, 128>}, {pipeline_mode = #tpu.pipeline_mode<synchronous>, transform_indices = @transform_3, window_bounds = array<i64: 128, 128>}, {pipeline_mode = #tpu.pipeline_mode<synchronous>, transform_indices = @transform_4, window_bounds = array<i64: 1, 128>}, {transform_indices = @transform_5, window_bounds = array<i64: 8, 128>}]} {
    %c0 = arith.constant 0 : index
    %c0_0 = arith.constant 0 : index
    %0 = vector.load %arg1[%c0, %c0_0] : memref<8x128xf32, #tpu.memory_space<vmem>>, vector<8x128xf32>
    %1 = arith.mulf %0, %0 : vector<8x128xf32>
    %cst = arith.constant dense<0.000000e+00> : vector<8xf32>
    %2 = vector.multi_reduction <add>, %1, %cst [1] : vector<8x128xf32> to vector<8xf32>
    %3 = vector.shape_cast %2 : vector<8xf32> to vector<8x1xf32>
    %4 = math.sqrt %3 : vector<8x1xf32>
    %cst_1 = arith.constant 9.99999974E-5 : f32
    %5 = vector.broadcast %cst_1 : f32 to vector<8x1xf32>
    %6 = arith.addf %4, %5 : vector<8x1xf32>
    %7 = tpu.reciprocal %6 {approx = true} : vector<8x1xf32> -> vector<8x1xf32>
    %8 = vector.broadcast %7 : vector<8x1xf32> to vector<8x128xf32>
    %9 = arith.mulf %0, %8 : vector<8x128xf32>
    %10 = arith.truncf %9 : vector<8x128xf32> to vector<8x128xbf16>
    %c0_2 = arith.constant 0 : index
    %c0_3 = arith.constant 0 : index
    %11 = vector.load %arg2[%c0_2, %c0_3] : memref<128x128xbf16, #tpu.memory_space<vmem>>, vector<128x128xbf16>
    %cst_4 = arith.constant dense<0.000000e+00> : vector<8x128xf32>
    %12 = tpu.matmul %10, %11, %cst_4 {dimension_numbers = #tpu.dot_dimension_numbers<[1], [0], [0], [1], [0, 0, 1, 1], [], []>} : vector<8x128xbf16>, vector<128x128xbf16>, vector<8x128xf32> -> vector<8x128xf32>
    %c0_5 = arith.constant 0 : index
    %c0_6 = arith.constant 0 : index
    %13 = vector.load %arg3[%c0_5, %c0_6] : memref<1x128xf32, #tpu.memory_space<vmem>>, vector<1x128xf32>
    %14 = vector.broadcast %13 : vector<1x128xf32> to vector<8x128xf32>
    %15 = arith.addf %12, %14 : vector<8x128xf32>
    %cst_7 = arith.constant 0.000000e+00 : f32
    %16 = vector.broadcast %cst_7 : f32 to vector<8x128xf32>
    %17 = arith.maximumf %15, %16 : vector<8x128xf32>
    %18 = arith.mulf %17, %17 : vector<8x128xf32>
    %cst_8 = arith.constant dense<0.000000e+00> : vector<8xf32>
    %19 = vector.multi_reduction <add>, %18, %cst_8 [1] : vector<8x128xf32> to vector<8xf32>
    %20 = vector.shape_cast %19 : vector<8xf32> to vector<8x1xf32>
    %21 = math.sqrt %20 : vector<8x1xf32>
    %cst_9 = arith.constant 9.99999974E-5 : f32
    %22 = vector.broadcast %cst_9 : f32 to vector<8x1xf32>
    %23 = arith.addf %21, %22 : vector<8x1xf32>
    %24 = tpu.reciprocal %23 {approx = true} : vector<8x1xf32> -> vector<8x1xf32>
    %25 = vector.broadcast %24 : vector<8x1xf32> to vector<8x128xf32>
    %26 = arith.mulf %17, %25 : vector<8x128xf32>
    %27 = arith.truncf %26 : vector<8x128xf32> to vector<8x128xbf16>
    %c0_10 = arith.constant 0 : index
    %c0_11 = arith.constant 0 : index
    %28 = vector.load %arg4[%c0_10, %c0_11] : memref<128x128xbf16, #tpu.memory_space<vmem>>, vector<128x128xbf16>
    %cst_12 = arith.constant dense<0.000000e+00> : vector<8x128xf32>
    %29 = tpu.matmul %27, %28, %cst_12 {dimension_numbers = #tpu.dot_dimension_numbers<[1], [0], [0], [1], [0, 0, 1, 1], [], []>} : vector<8x128xbf16>, vector<128x128xbf16>, vector<8x128xf32> -> vector<8x128xf32>
    %c0_13 = arith.constant 0 : index
    %c0_14 = arith.constant 0 : index
    %30 = vector.load %arg5[%c0_13, %c0_14] : memref<1x128xf32, #tpu.memory_space<vmem>>, vector<1x128xf32>
    %31 = vector.broadcast %30 : vector<1x128xf32> to vector<8x128xf32>
    %32 = arith.addf %29, %31 : vector<8x128xf32>
    %cst_15 = arith.constant 0.000000e+00 : f32
    %33 = vector.broadcast %cst_15 : f32 to vector<8x128xf32>
    %34 = arith.maximumf %32, %33 : vector<8x128xf32>
    %c0_16 = arith.constant 0 : index
    %c0_17 = arith.constant 0 : index
    %35 = vector.load %arg6[%c0_16, %c0_17] : memref<8x128xf32, #tpu.memory_space<vmem>>, vector<8x128xf32>
    tpu.vector_store %arg6[%c0_16, %c0_17], %34 {strides = array<i32>} : memref<8x128xf32, #tpu.memory_space<vmem>>, vector<8x128xf32>,
    return
  }
  func.func @transform_0(%arg0: i32) -> (i32, i32) {
    %c0_i32 = arith.constant 0 : i32
    %c0_i32_0 = arith.constant 0 : i32
    return %arg0, %c0_i32 : i32, i32
  }
  func.func @transform_1(%arg0: i32) -> (i32, i32) {
    %c0_i32 = arith.constant 0 : i32
    %c0_i32_0 = arith.constant 0 : i32
    %c0_i32_1 = arith.constant 0 : i32
    return %c0_i32, %c0_i32_0 : i32, i32
  }
  func.func @transform_2(%arg0: i32) -> (i32, i32) {
    %c0_i32 = arith.constant 0 : i32
    %c0_i32_0 = arith.constant 0 : i32
    %c0_i32_1 = arith.constant 0 : i32
    return %c0_i32, %c0_i32_0 : i32, i32
  }
  func.func @transform_3(%arg0: i32) -> (i32, i32) {
    %c0_i32 = arith.constant 0 : i32
    %c0_i32_0 = arith.constant 0 : i32
    %c0_i32_1 = arith.constant 0 : i32
    return %c0_i32, %c0_i32_0 : i32, i32
  }
  func.func @transform_4(%arg0: i32) -> (i32, i32) {
    %c0_i32 = arith.constant 0 : i32
    %c0_i32_0 = arith.constant 0 : i32
    %c0_i32_1 = arith.constant 0 : i32
    return %c0_i32, %c0_i32_0 : i32, i32
  }
  func.func @transform_5(%arg0: i32) -> (i32, i32) {
    %c0_i32 = arith.constant 0 : i32
    %c0_i32_0 = arith.constant 0 : i32
    return %arg0, %c0_i32 : i32, i32
  }
}

</mosaic_0001>

<llo_original>
// kernel: ff_mlp_forward.1
$region0: #{ff_mlp_forward.1}
  #allocation0 [shape = 'u32[]', space=smem, size = 0x4, offset = 0x4, fixed_abs, tag = 'smem constant byte address 0x4 - core index']
  #allocation1 [shape = 'u32[144,128]{1,0:T(1,128)}', space=vmem, size = 0x12000, scoped, tag = 'internal scratch']
  %s0 = inlined_call_operand.vmem [shape: f32[8,128], index: 0, kind: input, shape index: {}]
  %s1 = inlined_call_operand.hbm [shape: bf16[128,128], index: 1, kind: input, shape index: {}]
  %s2 = inlined_call_operand.vmem [shape: f32[1,128], index: 2, kind: input, shape index: {}]
  %s3 = inlined_call_operand.hbm [shape: bf16[128,128], index: 3, kind: input, shape index: {}]
  %s4 = inlined_call_operand.vmem [shape: f32[1,128], index: 4, kind: input, shape index: {}]
  %s5 = inlined_call_operand.hbm [shape: f32[8,128], index: 5, kind: output, shape index: {}]
  %s6 = sld [smem:[#allocation0]]
  $region38: #{ff_mlp_forward.1} parent=0
    _
  %s8 = ssub.s32 1, %s6
  %s9 = scalar_select 0, %s8, %s6
  $region1: #{ff_mlp_forward.1} parent=0
    #allocation2 [shape = 'u8[32768]{0}', space=vmem, size = 0x8000, scoped, tag = 'input window, operand 1, single buffered']
    #allocation3 [shape = 's32[1]{0}', space=sflag, size = 0x4, scoped, tag = 'scoped memory for ff_mlp_forward.1']
    #allocation4 [shape = 's32[1]{0}', space=sflag, size = 0x4, scoped, tag = 'scoped memory for ff_mlp_forward.1']
    #allocation5 [shape = 'u8[32768]{0}', space=vmem, size = 0x8000, scoped, tag = 'input window, operand 3, single buffered']
    #allocation6 [shape = 's32[1]{0}', space=sflag, size = 0x4, scoped, tag = 'scoped memory for ff_mlp_forward.1']
    #allocation7 [shape = 'u8[4096]{0}', space=vmem, size = 0x1000, scoped, tag = 'output window, operand 0, single buffered']
    %10 = vsyncpa [#allocation3], 0
    %11 = vsyncpa [#allocation6], 0
    %12 = vsyncpa [#allocation4], 0
    // Predicated region
    $region2: #{ff_mlp_forward.1} parent=1 // pred_check
      _
    $region3: #{ff_mlp_forward.1} parent=1 // pred_check_branch
      %14 = sbr.rel (0) target = $region5
    $region4: #{ff_mlp_forward.1} parent=1 // pred_region
      _
    $region5: #{ff_mlp_forward.1} parent=1 // pred_fallthru
      _
    // Predicated region
    $region6: #{ff_mlp_forward.1} parent=1 // pred_check
      _
    $region7: #{ff_mlp_forward.1} parent=1 // pred_check_branch
      %16 = sbr.rel (0) target = $region9
    $region8: #{ff_mlp_forward.1} parent=1 // pred_region
      %s18 = ssub.s32 1024, 1024
      %19 = vsyncadd [#allocation3], %s18
      %s20 = sshll.u32 [#allocation2], 4
      %s21 = int_to_ptr.vmem [resolvable:$true] %s20
      %26 = dma.hbm_to_vmem [thread:$0]  %s1, 1024, %s21, [#allocation3], 64, 64, 4
    $region9: #{ff_mlp_forward.1} parent=1 // pred_fallthru
      _
    // Predicated region
    $region10: #{ff_mlp_forward.1} parent=1 // pred_check
      _
    $region11: #{ff_mlp_forward.1} parent=1 // pred_check_branch
      %28 = sbr.rel (0) target = $region13
    $region12: #{ff_mlp_forward.1} parent=1 // pred_region
      _
    $region13: #{ff_mlp_forward.1} parent=1 // pred_fallthru
      _
    // Predicated region
    $region14: #{ff_mlp_forward.1} parent=1 // pred_check
      _
    $region15: #{ff_mlp_forward.1} parent=1 // pred_check_branch
      %30 = sbr.rel (0) target = $region17
    $region16: #{ff_mlp_forward.1} parent=1 // pred_region
      %s32 = ssub.s32 1024, 1024
      %33 = vsyncadd [#allocation6], %s32
      %s34 = sshll.u32 [#allocation5], 4
      %s35 = int_to_ptr.vmem [resolvable:$true] %s34
      %40 = dma.hbm_to_vmem [thread:$0]  %s3, 1024, %s35, [#allocation6], 64, 64, 4
    $region17: #{ff_mlp_forward.1} parent=1 // pred_fallthru
      _
    // Predicated region
    $region18: #{ff_mlp_forward.1} parent=1 // pred_check
      _
    $region19: #{ff_mlp_forward.1} parent=1 // pred_check_branch
      %42 = sbr.rel (0) target = $region21
    $region20: #{ff_mlp_forward.1} parent=1 // pred_region
      _
    $region21: #{ff_mlp_forward.1} parent=1 // pred_fallthru
      _
    // Predicated region
    $region22: #{ff_mlp_forward.1} parent=1 // pred_check
      _
    $region23: #{ff_mlp_forward.1} parent=1 // pred_check_branch
      %44 = sbr.rel (0) target = $region25
    $region24: #{ff_mlp_forward.1} parent=1 // pred_region
      %45 = dma.done [#allocation3], 1024
    $region25: #{ff_mlp_forward.1} parent=1 // pred_fallthru
      _
    // Predicated region
    $region26: #{ff_mlp_forward.1} parent=1 // pred_check
      _
    $region27: #{ff_mlp_forward.1} parent=1 // pred_check_branch
      %47 = sbr.rel (0) target = $region29
    $region28: #{ff_mlp_forward.1} parent=1 // pred_region
      %48 = dma.done [#allocation6], 1024
    $region29: #{ff_mlp_forward.1} parent=1 // pred_fallthru
      _
    %v50 = vld [vmem:[%s0] sm:$0xff]
    %v51 = vmul.f32 %v50, %v50
    %52 = vadd.xlane.f32.xlu0 %v51
    %v53 = vpop.xlane.xlu0 %52
    %v54 = vrsqrt.pop %v53
    %v55 = vmul.f32 %v53, %v54
    %vm56 = vcmp.eq.f32.partialorder %v53, inf
    %v57 = vsel %vm56, %v53, %v55
    %vm58 = vcmp.eq.f32.partialorder %v53, 0.0
    %v59 = vand.u32 %v53, 2147483648
    %v60 = vsel %vm58, %v59, %v57
    %v61 = vadd.f32 %v60, 0.0001
    %v62 = vrcp.pop %v61
    %v63 = vmul.f32 %v50, %v62
    %v64 = vpack.c.bf16 %v63, %v63
    %v65 = vld [vmem:[#allocation2] sm:$0xf]
    %v66 = vld [vmem:[#allocation2 + $0x4] sm:$0xf]
    %v67 = vld [vmem:[#allocation2 + $0x8] sm:$0xf]
    %v68 = vld [vmem:[#allocation2 + $0xc] sm:$0xf]
    %v69 = vld [vmem:[#allocation2 + $0x10] sm:$0xf]
    %v70 = vld [vmem:[#allocation2 + $0x14] sm:$0xf]
    %v71 = vld [vmem:[#allocation2 + $0x18] sm:$0xf]
    %v72 = vld [vmem:[#allocation2 + $0x1c] sm:$0xf]
    %v73 = vld [vmem:[#allocation2 + $0x20] sm:$0xf]
    %v74 = vld [vmem:[#allocation2 + $0x24] sm:$0xf]
    %v75 = vld [vmem:[#allocation2 + $0x28] sm:$0xf]
    %v76 = vld [vmem:[#allocation2 + $0x2c] sm:$0xf]
    %v77 = vld [vmem:[#allocation2 + $0x30] sm:$0xf]
    %v78 = vld [vmem:[#allocation2 + $0x34] sm:$0xf]
    %v79 = vld [vmem:[#allocation2 + $0x38] sm:$0xf]
    %v80 = vld [vmem:[#allocation2 + $0x3c] sm:$0xf]
    %v81 = vld [vmem:[%s2] sm:$0x1]
    %v83 = vlaneseq
    %v84 = vshrl.u32 %v83, 7
    %v85 = vsub.s32 0, %v84
    %v86 = vrot.slane %v81, %v85
    %v104 = vunpack.c.l.b16 %v65
    %v105 = vunpack.c.l.b16 %v66
    %v106 = vunpack.c.l.b16 %v67
    %v107 = vunpack.c.l.b16 %v68
    %v108 = vunpack.c.l.b16 %v69
    %v109 = vunpack.c.l.b16 %v70
    %v110 = vunpack.c.l.b16 %v71
    %v111 = vunpack.c.l.b16 %v72
    %v112 = vunpack.c.l.b16 %v73
    %v113 = vunpack.c.l.b16 %v74
    %v114 = vunpack.c.l.b16 %v75
    %v115 = vunpack.c.l.b16 %v76
    %v116 = vunpack.c.l.b16 %v77
    %v117 = vunpack.c.l.b16 %v78
    %v118 = vunpack.c.l.b16 %v79
    %v119 = vunpack.c.l.b16 %v80
    %v120 = vpack.c.b16 %v105, %v104
    %v121 = vpack.c.b16 %v107, %v106
    %v122 = vpack.c.b16 %v109, %v108
    %v123 = vpack.c.b16 %v111, %v110
    %v124 = vpack.c.b16 %v113, %v112
    %v125 = vpack.c.b16 %v115, %v114
    %v126 = vpack.c.b16 %v117, %v116
    %v127 = vpack.c.b16 %v119, %v118
    %136 = vmatprep.subr.bf16.mxu0 0
    %137 = vmatpush1.bf16.msra.mxu0 %v127
    %138 = vmatprep.subr.bf16.mxu0 0
    %139 = vmatpush1.bf16.msra.mxu0 %v126
    %140 = vmatprep.subr.bf16.mxu0 0
    %141 = vmatpush1.bf16.msra.mxu0 %v125
    %142 = vmatprep.subr.bf16.mxu0 0
    %143 = vmatpush1.bf16.msra.mxu0 %v124
    %144 = vmatprep.subr.bf16.mxu0 0
    %145 = vmatpush1.bf16.msra.mxu0 %v123
    %146 = vmatprep.subr.bf16.mxu0 0
    %147 = vmatpush1.bf16.msra.mxu0 %v122
    %148 = vmatprep.subr.bf16.mxu0 0
    %149 = vmatpush1.bf16.msra.mxu0 %v121
    %150 = vmatprep.subr.bf16.mxu0 0
    %151 = vmatpush1.bf16.msra.mxu0 %v120
    %152 = vmatprep.subr.bf16.mxu0 0
    %153 = vmatpush2.bf16.msra.mxu0 0
    %154 = vmatprep.subr.bf16.mxu0 0
    %155 = vmatpush2.bf16.msra.mxu0 0
    %156 = vmatprep.subr.bf16.mxu0 0
    %157 = vmatpush2.bf16.msra.mxu0 0
    %158 = vmatprep.subr.bf16.mxu0 0
    %159 = vmatpush2.bf16.msra.mxu0 0
    %160 = vmatprep.subr.bf16.mxu0 0
    %161 = vmatpush2.bf16.msra.mxu0 0
    %162 = vmatprep.subr.bf16.mxu0 0
    %163 = vmatpush2.bf16.msra.mxu0 0
    %164 = vmatprep.subr.bf16.mxu0 0
    %165 = vmatpush2.bf16.msra.mxu0 0
    %166 = vmatprep.subr.bf16.mxu0 0
    %167 = vmatpush2.bf16.msra.mxu0 0
    %168 = vmatprep.mubr.bf16.mxu0 0
    %169 = vmatmul.mubr.bf16.gmra.mxu0 %v64
    %v170 = vpop.f32.mrf.mxu0
    %v171 = vadd.f32 %v86, %v170
    %v172 = vpop.f32.mrf.mxu0
    %v173 = vpop.f32.mrf.mxu0
    %v174 = vpop.f32.mrf.mxu0
    %175 = vdwg.mxu0
    %v176 = vmax.f32 %v171, 0.0
    %v177 = vmul.f32 %v176, %v176
    %178 = vadd.xlane.f32.xlu0 %v177
    %v179 = vpop.xlane.xlu0 %178
    %v180 = vrsqrt.pop %v179
    %v181 = vmul.f32 %v179, %v180
    %vm182 = vcmp.eq.f32.partialorder %v179, inf
    %v183 = vsel %vm182, %v179, %v181
    %vm184 = vcmp.eq.f32.partialorder %v179, 0.0
    %v185 = vand.u32 %v179, 2147483648
    %v186 = vsel %vm184, %v185, %v183
    %v187 = vadd.f32 %v186, 0.0001
    %v188 = vrcp.pop %v187
    %v189 = vmul.f32 %v176, %v188
    %v190 = vpack.c.bf16 %v189, %v189
    %v191 = vld [vmem:[#allocation5] sm:$0xf]
    %v192 = vld [vmem:[#allocation5 + $0x4] sm:$0xf]
    %v193 = vld [vmem:[#allocation5 + $0x8] sm:$0xf]
    %v194 = vld [vmem:[#allocation5 + $0xc] sm:$0xf]
    %v195 = vld [vmem:[#allocation5 + $0x10] sm:$0xf]
    %v196 = vld [vmem:[#allocation5 + $0x14] sm:$0xf]
    %v197 = vld [vmem:[#allocation5 + $0x18] sm:$0xf]
    %v198 = vld [vmem:[#allocation5 + $0x1c] sm:$0xf]
    %v199 = vld [vmem:[#allocation5 + $0x20] sm:$0xf]
    %v200 = vld [vmem:[#allocation5 + $0x24] sm:$0xf]
    %v201 = vld [vmem:[#allocation5 + $0x28] sm:$0xf]
    %v202 = vld [vmem:[#allocation5 + $0x2c] sm:$0xf]
    %v203 = vld [vmem:[#allocation5 + $0x30] sm:$0xf]
    %v204 = vld [vmem:[#allocation5 + $0x34] sm:$0xf]
    %v205 = vld [vmem:[#allocation5 + $0x38] sm:$0xf]
    %v206 = vld [vmem:[#allocation5 + $0x3c] sm:$0xf]
    %v207 = vld [vmem:[%s4] sm:$0x1]
    %v209 = vlaneseq
    %v210 = vshrl.u32 %v209, 7
    %v211 = vsub.s32 0, %v210
    %v212 = vrot.slane %v207, %v211
    %v230 = vunpack.c.l.b16 %v191
    %v231 = vunpack.c.l.b16 %v192
    %v232 = vunpack.c.l.b16 %v193
    %v233 = vunpack.c.l.b16 %v194
    %v234 = vunpack.c.l.b16 %v195
    %v235 = vunpack.c.l.b16 %v196
    %v236 = vunpack.c.l.b16 %v197
    %v237 = vunpack.c.l.b16 %v198
    %v238 = vunpack.c.l.b16 %v199
    %v239 = vunpack.c.l.b16 %v200
    %v240 = vunpack.c.l.b16 %v201
    %v241 = vunpack.c.l.b16 %v202
    %v242 = vunpack.c.l.b16 %v203
    %v243 = vunpack.c.l.b16 %v204
    %v244 = vunpack.c.l.b16 %v205
    %v245 = vunpack.c.l.b16 %v206
    %v246 = vpack.c.b16 %v231, %v230
    %v247 = vpack.c.b16 %v233, %v232
    %v248 = vpack.c.b16 %v235, %v234
    %v249 = vpack.c.b16 %v237, %v236
    %v250 = vpack.c.b16 %v239, %v238
    %v251 = vpack.c.b16 %v241, %v240
    %v252 = vpack.c.b16 %v243, %v242
    %v253 = vpack.c.b16 %v245, %v244
    %262 = vmatprep.subr.bf16.mxu0 0
    %263 = vmatpush1.bf16.msra.mxu0 %v253
    %264 = vmatprep.subr.bf16.mxu0 0
    %265 = vmatpush1.bf16.msra.mxu0 %v252
    %266 = vmatprep.subr.bf16.mxu0 0
    %267 = vmatpush1.bf16.msra.mxu0 %v251
    %268 = vmatprep.subr.bf16.mxu0 0
    %269 = vmatpush1.bf16.msra.mxu0 %v250
    %270 = vmatprep.subr.bf16.mxu0 0
    %271 = vmatpush1.bf16.msra.mxu0 %v249
    %272 = vmatprep.subr.bf16.mxu0 0
    %273 = vmatpush1.bf16.msra.mxu0 %v248
    %274 = vmatprep.subr.bf16.mxu0 0
    %275 = vmatpush1.bf16.msra.mxu0 %v247
    %276 = vmatprep.subr.bf16.mxu0 0
    %277 = vmatpush1.bf16.msra.mxu0 %v246
    %278 = vmatprep.subr.bf16.mxu0 0
    %279 = vmatpush2.bf16.msra.mxu0 0
    %280 = vmatprep.subr.bf16.mxu0 0
    %281 = vmatpush2.bf16.msra.mxu0 0
    %282 = vmatprep.subr.bf16.mxu0 0
    %283 = vmatpush2.bf16.msra.mxu0 0
    %284 = vmatprep.subr.bf16.mxu0 0
    %285 = vmatpush2.bf16.msra.mxu0 0
    %286 = vmatprep.subr.bf16.mxu0 0
    %287 = vmatpush2.bf16.msra.mxu0 0
    %288 = vmatprep.subr.bf16.mxu0 0
    %289 = vmatpush2.bf16.msra.mxu0 0
    %290 = vmatprep.subr.bf16.mxu0 0
    %291 = vmatpush2.bf16.msra.mxu0 0
    %292 = vmatprep.subr.bf16.mxu0 0
    %293 = vmatpush2.bf16.msra.mxu0 0
    %294 = vmatprep.mubr.bf16.mxu0 0
    %295 = vmatmul.mubr.bf16.gmra.mxu0 %v190
    %v296 = vpop.f32.mrf.mxu0
    %v297 = vadd.f32 %v212, %v296
    %v298 = vpop.f32.mrf.mxu0
    %v299 = vpop.f32.mrf.mxu0
    %v300 = vpop.f32.mrf.mxu0
    %301 = vdwg.mxu0
    %v302 = vmax.f32 %v297, 0.0
    %303 = vst [vmem:[#allocation7] sm:$0xff] %v302
    // Predicated region
    $region30: #{ff_mlp_forward.1} parent=1 // pred_check
      _
    $region31: #{ff_mlp_forward.1} parent=1 // pred_check_branch
      %305 = sbr.rel (0) target = $region33
    $region32: #{ff_mlp_forward.1} parent=1 // pred_region
      %s307 = ssub.s32 128, 128
      %308 = vsyncadd [#allocation4], %s307
      %s310 = sshll.u32 [#allocation7], 4
      %s311 = int_to_ptr.vmem [resolvable:$true] %s310
      %313 = dma.vmem_to_hbm [thread:$0]  %s311, 128, %s5, [#allocation4]
    $region33: #{ff_mlp_forward.1} parent=1 // pred_fallthru
      _
    // Predicated region
    $region34: #{ff_mlp_forward.1} parent=1 // pred_check
      _
    $region35: #{ff_mlp_forward.1} parent=1 // pred_check_branch
      %315 = sbr.rel (0) target = $region37
    $region36: #{ff_mlp_forward.1} parent=1 // pred_region
      %316 = dma.done [#allocation4], 128
    $region37: #{ff_mlp_forward.1} parent=1 // pred_fallthru
      _
    %317 = vsyncpa [#allocation3], 1
    %318 = vsyncpa [#allocation6], 1
    %319 = vsyncpa [#allocation4], 1

</llo_original>
